<compile_context>
chip_gen: v5e
topology: v5e:2x2
jax: 0.10.0
libtpu: 0.0.40
codegen_flags: <defaults>
</compile_context>

<pallas_src>
import functools

import jax
import jax.numpy as jnp
from jax import lax
from jax.experimental import pallas as pl
from jax.experimental.pallas import tpu as pltpu

BN_EPS = 1e-5
LEAKY_SLOPE = 0.01      # torch.nn.LeakyReLU default
MXU_ALIGN = 256         # v6e/v7x MXU is 2x256^2
LANE_ALIGN = 128        # vreg lane width


def _round_up(n, m):
    return ((n + m - 1) // m) * m


def _pad2(a, rows, cols):
    pr, pc = rows - a.shape[0], cols - a.shape[1]
    if pr == 0 and pc == 0:
        return a
    return jnp.pad(a, ((0, pr), (0, pc)))


# ---------------------------------------------------------------------------
# Phase 1: h_pre = x @ W1  (bias dropped — cancelled by training-mode BN), plus
#          PER-TILE partial batch statistics (sum, sum of squares). No resident
#          accumulator -> the batch axis is "parallel" (v7x megacore safe).
# ---------------------------------------------------------------------------
def linear_stats_kernel(x_ref, w1_ref, hpre_ref, stats_ref):
    # bf16 MXU matmul, f32 accumulation.
    h = jnp.dot(x_ref[...].astype(w1_ref.dtype), w1_ref[...],
                preferred_element_type=jnp.float32)                 # [tb, Lp] f32
    hpre_ref[...] = h.astype(hpre_ref.dtype)                        # bf16 store: half HBM bytes

    s = jnp.sum(h, axis=0, keepdims=True)                           # [1, Lp]
    ss = jnp.sum(h * h, axis=0, keepdims=True)                      # [1, Lp]
    stats_ref[...] = jnp.concatenate([s, ss], axis=0)[None]         # [1, 2, Lp] partial


# ---------------------------------------------------------------------------
# Phase 2: BatchNorm (from reduced stats) + LeakyReLU + fused mu/log_var head
#          + reparameterize; packed lane-dense output [tb, 3*Lat_p] = [z | mu | lv].
# ---------------------------------------------------------------------------
def bn_heads_kernel(hpre_ref, stats_ref, gamma_ref, beta_ref,
                    wh_ref, bh_ref, eps_ref, out_ref, *, batch, latent_p):
    inv_b = jnp.float32(1.0 / batch)                                # real (unpadded) batch
    mean = stats_ref[0:1, :] * inv_b                                # [1, Lp]
    var = stats_ref[1:2, :] * inv_b - mean * mean                   # biased var (BN training)
    var = jnp.maximum(var, 0.0)                                     # guard f32 cancellation

    # Folded BN affine: one FMA over the [tb, Lp] tile; rsqrt goes to the EUP slot.
    scale = gamma_ref[...] * lax.rsqrt(var + BN_EPS)                # [1, Lp]
    shift = beta_ref[...] - mean * scale                            # [1, Lp]

    h = hpre_ref[...].astype(jnp.float32) * scale + shift           # f32 elementwise (v5e-safe)
    h = jnp.where(h >= 0, h, LEAKY_SLOPE * h)                       # LeakyReLU

    # Fused mu/log_var head: one matmul producing [tb, 2*latent_p] (N is a 256-multiple).
    heads = jnp.dot(h.astype(wh_ref.dtype), wh_ref[...],
                    preferred_element_type=jnp.float32) + bh_ref[...]
    mu = heads[:, :latent_p]                                        # lane-aligned slices
    lv = heads[:, latent_p:]

    # Reparameterize: z = eps * exp(0.5*log_var) + mu
    z = eps_ref[...] * jnp.exp(0.5 * lv) + mu

    out_ref[...] = jnp.concatenate([z, mu, lv], axis=-1).astype(out_ref.dtype)


# ---------------------------------------------------------------------------
# Generation-aware VMEM budget + batch-tile selection.
# ---------------------------------------------------------------------------
def _vmem_budget_bytes():
    cap = 64 << 20                                   # conservative default (v7x physical)
    try:
        info = pltpu.get_tpu_info()
        v = getattr(info, "vmem_capacity_bytes", None)
        if v:
            cap = int(v)
    except Exception:
        pass
    cap = max(32 << 20, min(cap, 128 << 20))
    return cap // 2                                  # scoped limit we request; leaves headroom


def _pick_batch_tile(batch, kp, lp, latp, vmem_limit):
    # Streamed, double-buffered bytes per batch row (worst of the two phases).
    per_row = max(2 * (kp * 4 + lp * 2),                     # phase 1: x f32 + h_pre bf16
                  2 * (lp * 2 + latp * 4 + 3 * latp * 4))    # phase 2: h_pre + eps + out
    # Grid-invariant weights (conservatively counted as double-buffered) + slack.
    resident = max(2 * kp * lp * 2, 2 * lp * 2 * latp * 2) + (2 << 20)
    avail = int(vmem_limit * 0.85) - resident
    tb = 16
    for cand in (512, 256, 128, 64, 32, 16):
        if avail > 0 and cand * per_row <= avail:
            tb = cand
            break
    # Never tile wider than the (sublane-rounded) batch itself.
    return min(tb, _round_up(batch, 8))


# ---------------------------------------------------------------------------
# Host wrapper.
# ---------------------------------------------------------------------------
def encoder_forward(x, params, eps, latent_dimension):
    """x: [B, in_dim] f32; eps: [B, latent] f32; params: dict (see init_params)."""
    B = x.shape[0]
    kp, lp = params["w1"].shape
    latp = params["w_heads"].shape[1] // 2

    vmem_limit = _vmem_budget_bytes()
    tb = _pick_batch_tile(B, kp, lp, latp, vmem_limit)
    b_pad = _round_up(B, tb)
    nb = b_pad // tb

    # Zero padding is exact: padded K columns hit zero W1 rows; padded batch rows are
    # all-zero (no bias before BN) so they add exactly 0 to sum / sumsq.
    xp = _pad2(x, b_pad, kp)
    epsp = _pad2(eps, b_pad, latp)

    # ---- phase 1: Linear + per-tile batch stats (fully parallel batch axis) ----
    h_pre, partial_stats = pl.pallas_call(
        linear_stats_kernel,
        grid=(nb,),
        in_specs=[
            pl.BlockSpec((tb, kp), lambda i: (i, 0)),
            pl.BlockSpec((kp, lp), lambda i: (0, 0)),
        ],
        out_specs=(
            pl.BlockSpec((tb, lp), lambda i: (i, 0)),
            pl.BlockSpec((1, 2, lp), lambda i: (i, 0, 0)),   # per-tile partial stats
        ),
        out_shape=(
            jax.ShapeDtypeStruct((b_pad, lp), jnp.bfloat16),  # bf16 intermediate
            jax.ShapeDtypeStruct((nb, 2, lp), jnp.float32),
        ),
        compiler_params=pltpu.CompilerParams(
            dimension_semantics=("parallel",), vmem_limit_bytes=vmem_limit),
    )(xp, params["w1"])

    # Tiny follow-up reduce of the per-tile partials (nb x 2 x Lp -> 2 x Lp).
    stats = jnp.sum(partial_stats, axis=0)

    # ---- phase 2: BN + LeakyReLU + fused heads + reparameterize (parallel) ----
    packed = pl.pallas_call(
        functools.partial(bn_heads_kernel, batch=B, latent_p=latp),
        grid=(nb,),
        in_specs=[
            pl.BlockSpec((tb, lp), lambda i: (i, 0)),
            pl.BlockSpec((2, lp), lambda i: (0, 0)),
            pl.BlockSpec((1, lp), lambda i: (0, 0)),
            pl.BlockSpec((1, lp), lambda i: (0, 0)),
            pl.BlockSpec((lp, 2 * latp), lambda i: (0, 0)),
            pl.BlockSpec((1, 2 * latp), lambda i: (0, 0)),
            pl.BlockSpec((tb, latp), lambda i: (i, 0)),
        ],
        out_specs=pl.BlockSpec((tb, 3 * latp), lambda i: (i, 0)),
        out_shape=jax.ShapeDtypeStruct((b_pad, 3 * latp), jnp.float32),
        compiler_params=pltpu.CompilerParams(
            dimension_semantics=("parallel",), vmem_limit_bytes=vmem_limit),
    )(h_pre, stats, params["gamma"], params["beta"],
      params["w_heads"], params["b_heads"], epsp)

    # Strip the lane/batch padding in JAX.
    z = packed[:B, :latent_dimension]
    mu = packed[:B, latp:latp + latent_dimension]
    log_var = packed[:B, 2 * latp:2 * latp + latent_dimension]
    return z, mu, log_var


def init_params(key, in_dimension, layer_1d, latent_dimension, weight_dtype=jnp.bfloat16):
    """Deterministic init mirroring torch defaults, zero-padded to MXU/lane alignment."""
    ks = jax.random.split(key, 6)

    def linear(kw, kb, fan_in, fan_out):
        bound = 1.0 / (fan_in ** 0.5)
        w = jax.random.uniform(kw, (fan_in, fan_out), jnp.float32, -bound, bound)
        b = jax.random.uniform(kb, (1, fan_out), jnp.float32, -bound, bound)
        return w, b

    w1, b1 = linear(ks[0], ks[1], in_dimension, layer_1d)
    w_mu, b_mu = linear(ks[2], ks[3], layer_1d, latent_dimension)
    w_lv, b_lv = linear(ks[4], ks[5], layer_1d, latent_dimension)

    kp = _round_up(in_dimension, MXU_ALIGN)
    lp = _round_up(layer_1d, MXU_ALIGN)
    latp = _round_up(latent_dimension, LANE_ALIGN)

    w_heads = jnp.concatenate(
        [_pad2(w_mu, layer_1d, latp), _pad2(w_lv, layer_1d, latp)], axis=1)
    b_heads = jnp.concatenate(
        [_pad2(b_mu, 1, latp), _pad2(b_lv, 1, latp)], axis=1)

    return {
        # matmul weights stored bf16 (MXU-native on v6e/v7x, half the VMEM/HBM bytes)
        "w1": _pad2(w1, kp, lp).astype(weight_dtype),
        # b1 is exactly cancelled by training-mode BatchNorm's mean subtraction;
        # kept for parity with the PyTorch module but never fed to the kernel.
        "b1": b1,
        "gamma": _pad2(jnp.ones((1, layer_1d), jnp.float32), 1, lp),
        "beta": jnp.zeros((1, lp), jnp.float32),
        # fused mu / log_var head: [Lp, 2*latent_p] weight, [1, 2*latent_p] bias
        "w_heads": _pad2(w_heads, lp, 2 * latp).astype(weight_dtype),
        "b_heads": b_heads,
    }


def encoder_reference(x, params, eps, latent_dimension):
    """Pure-JAX reference mirroring the kernel dtype policy (bf16 MXU, bf16 h_pre, f32 math)."""
    kp = params["w1"].shape[0]
    latp = params["w_heads"].shape[1] // 2
    xk = _pad2(x, x.shape[0], kp)
    ek = _pad2(eps, eps.shape[0], latp)

    h = jnp.dot(xk.astype(params["w1"].dtype), params["w1"],
                preferred_element_type=jnp.float32)
    mean = jnp.mean(h, axis=0, keepdims=True)
    var = jnp.maximum(jnp.mean(h * h, axis=0, keepdims=True) - mean * mean, 0.0)
    scale = params["gamma"] * lax.rsqrt(var + BN_EPS)
    shift = params["beta"] - mean * scale
    hb = h.astype(jnp.bfloat16).astype(jnp.float32)      # mirrors bf16 h_pre round trip
    hn = hb * scale + shift
    hn = jnp.where(hn >= 0, hn, LEAKY_SLOPE * hn)
    heads = jnp.dot(hn.astype(params["w_heads"].dtype), params["w_heads"],
                    preferred_element_type=jnp.float32) + params["b_heads"]
    mu = heads[:, :latp]
    lv = heads[:, latp:]
    z = ek * jnp.exp(0.5 * lv) + mu
    return (z[:, :latent_dimension], mu[:, :latent_dimension], lv[:, :latent_dimension])


if __name__ == "__main__":
    # small shapes consistent with the module
    batch = 8
    in_dimension = 64
    layer_1d = 32
    latent_dimension = 16

    key = jax.random.PRNGKey(0)
    k_params, k_x, k_eps = jax.random.split(key, 3)

    params = init_params(k_params, in_dimension, layer_1d, latent_dimension)
    x = jax.random.normal(k_x, (batch, in_dimension), jnp.float32)
    # eps ~ N(0,1) for the reparameterization trick (drawn outside the kernel)
    eps = jax.random.normal(k_eps, (batch, latent_dimension), jnp.float32)

    z, mu, log_var = encoder_forward(x, params, eps, latent_dimension)
    jax.block_until_ready((z, mu, log_var))

    # shape sanity
    assert z.shape == (batch, latent_dimension)
    assert mu.shape == (batch, latent_dimension)
    assert log_var.shape == (batch, latent_dimension)

    # numerical sanity vs pure-JAX reference
    z_ref, mu_ref, lv_ref = encoder_reference(x, params, eps, latent_dimension)
    assert jnp.allclose(mu, mu_ref, atol=1e-2, rtol=1e-2)
    assert jnp.allclose(log_var, lv_ref, atol=1e-2, rtol=1e-2)
    assert jnp.allclose(z, z_ref, atol=1e-2, rtol=1e-2)

    print("KERNEL_OK")
</pallas_src>

<mosaic_0001>
module attributes {stable_mosaic.version = 11 : i64} {
  func.func @linear_stats_kernel(%arg0: i32, %arg1: memref<8x256xf32, #tpu.memory_space<vmem>>, %arg2: memref<256x256xbf16, #tpu.memory_space<vmem>>, %arg3: memref<8x256xbf16, #tpu.memory_space<vmem>>, %arg4: memref<1x2x256xf32, #tpu.memory_space<vmem>>) attributes {dimension_semantics = [#tpu.dimension_semantics<parallel>], iteration_bounds = array<i64: 1>, scalar_prefetch = 0 : i64, scratch_operands = 0 : i64, tpu.core_type = #tpu.core_type<tc>, window_params = [{transform_indices = @transform_0, window_bounds = array<i64: 8, 256>}, {pipeline_mode = #tpu.pipeline_mode<synchronous>, transform_indices = @transform_1, window_bounds = array<i64: 256, 256>}, {transform_indices = @transform_2, window_bounds = array<i64: 8, 256>}, {transform_indices = @transform_3, window_bounds = array<i64: 1, 2, 256>}]} {
    %c0 = arith.constant 0 : index
    %c0_0 = arith.constant 0 : index
    %0 = vector.load %arg1[%c0, %c0_0] : memref<8x256xf32, #tpu.memory_space<vmem>>, vector<8x256xf32>
    %1 = arith.truncf %0 : vector<8x256xf32> to vector<8x256xbf16>
    %c0_1 = arith.constant 0 : index
    %c0_2 = arith.constant 0 : index
    %2 = vector.load %arg2[%c0_1, %c0_2] : memref<256x256xbf16, #tpu.memory_space<vmem>>, vector<256x256xbf16>
    %cst = arith.constant dense<0.000000e+00> : vector<8x256xf32>
    %3 = tpu.matmul %1, %2, %cst {dimension_numbers = #tpu.dot_dimension_numbers<[1], [0], [0], [1], [0, 0, 1, 1], [], []>} : vector<8x256xbf16>, vector<256x256xbf16>, vector<8x256xf32> -> vector<8x256xf32>
    %4 = arith.truncf %3 : vector<8x256xf32> to vector<8x256xbf16>
    %c0_3 = arith.constant 0 : index
    %c0_4 = arith.constant 0 : index
    %5 = vector.load %arg3[%c0_3, %c0_4] : memref<8x256xbf16, #tpu.memory_space<vmem>>, vector<8x256xbf16>
    tpu.vector_store %arg3[%c0_3, %c0_4], %4 {strides = array<i32>} : memref<8x256xbf16, #tpu.memory_space<vmem>>, vector<8x256xbf16>,
    %cst_5 = arith.constant dense<0.000000e+00> : vector<256xf32>
    %6 = vector.multi_reduction <add>, %3, %cst_5 [0] : vector<8x256xf32> to vector<256xf32>
    %7 = vector.shape_cast %6 : vector<256xf32> to vector<1x256xf32>
    %8 = arith.mulf %3, %3 : vector<8x256xf32>
    %cst_6 = arith.constant dense<0.000000e+00> : vector<256xf32>
    %9 = vector.multi_reduction <add>, %8, %cst_6 [0] : vector<8x256xf32> to vector<256xf32>
    %10 = vector.shape_cast %9 : vector<256xf32> to vector<1x256xf32>
    %11 = tpu.concatenate %7, %10 in 0 : vector<1x256xf32>, vector<1x256xf32> -> vector<2x256xf32>
    %12 = vector.shape_cast %11 : vector<2x256xf32> to vector<1x2x256xf32>
    %c0_7 = arith.constant 0 : index
    %c0_8 = arith.constant 0 : index
    %c0_9 = arith.constant 0 : index
    %13 = vector.load %arg4[%c0_7, %c0_8, %c0_9] : memref<1x2x256xf32, #tpu.memory_space<vmem>>, vector<1x2x256xf32>
    tpu.vector_store %arg4[%c0_7, %c0_8, %c0_9], %12 {strides = array<i32>} : memref<1x2x256xf32, #tpu.memory_space<vmem>>, vector<1x2x256xf32>,
    return
  }
  func.func @transform_0(%arg0: i32) -> (i32, i32) {
    %c0_i32 = arith.constant 0 : i32
    %c0_i32_0 = arith.constant 0 : i32
    return %arg0, %c0_i32 : i32, i32
  }
  func.func @transform_1(%arg0: i32) -> (i32, i32) {
    %c0_i32 = arith.constant 0 : i32
    %c0_i32_0 = arith.constant 0 : i32
    %c0_i32_1 = arith.constant 0 : i32
    return %c0_i32, %c0_i32_0 : i32, i32
  }
  func.func @transform_2(%arg0: i32) -> (i32, i32) {
    %c0_i32 = arith.constant 0 : i32
    %c0_i32_0 = arith.constant 0 : i32
    return %arg0, %c0_i32 : i32, i32
  }
  func.func @transform_3(%arg0: i32) -> (i32, i32, i32) {
    %c0_i32 = arith.constant 0 : i32
    %c0_i32_0 = arith.constant 0 : i32
    %c0_i32_1 = arith.constant 0 : i32
    return %arg0, %c0_i32, %c0_i32_0 : i32, i32, i32
  }
}

</mosaic_0001>

<llo_original>
// kernel: tpu_custom_call.1
$region0: #{tpu_custom_call.1}
  #allocation0 [shape = 'u32[]', space=smem, size = 0x4, offset = 0x4, fixed_abs, tag = 'smem constant byte address 0x4 - core index']
  #allocation1 [shape = 'u32[72,128]{1,0:T(1,128)}', space=vmem, size = 0x9000, scoped, tag = 'internal scratch']
  %s0 = inlined_call_operand.hbm [shape: f32[8,256], index: 0, kind: input, shape index: {}]
  %s1 = inlined_call_operand.hbm [shape: bf16[256,256], index: 1, kind: input, shape index: {}]
  %s2 = inlined_call_operand.hbm [shape: bf16[8,256], index: 2, kind: output, shape index: {0}]
  %s3 = inlined_call_operand.hbm [shape: f32[1,2,256], index: 3, kind: output, shape index: {1}]
  %4 = xla_tuple %s2, %s3
  %s5 = sld [smem:[#allocation0]]
  $region34: #{tpu_custom_call.1} parent=0
    _
  %s7 = ssub.s32 1, %s5
  %s8 = scalar_select 0, %s7, %s5
  $region1: #{tpu_custom_call.1} parent=0
    #allocation2 [shape = 'u8[8192]{0}', space=vmem, size = 0x2000, scoped, tag = 'input window, operand 0, single buffered']
    #allocation3 [shape = 's32[1]{0}', space=sflag, size = 0x4, scoped, tag = 'scoped memory for tpu_custom_call.1']
    #allocation4 [shape = 's32[1]{0}', space=sflag, size = 0x4, scoped, tag = 'scoped memory for tpu_custom_call.1']
    #allocation5 [shape = 'u8[131072]{0}', space=vmem, size = 0x20000, scoped, tag = 'input window, operand 1, single buffered']
    #allocation6 [shape = 's32[1]{0}', space=sflag, size = 0x4, scoped, tag = 'scoped memory for tpu_custom_call.1']
    #allocation7 [shape = 'u8[4096]{0}', space=vmem, size = 0x1000, scoped, tag = 'output window, operand 0, single buffered']
    #allocation8 [shape = 'u8[2048]{0}', space=vmem, size = 0x800, scoped, tag = 'output window, operand 1, single buffered']
    #allocation9 [shape = 's32[1]{0}', space=sflag, size = 0x4, scoped, tag = 'scoped memory for tpu_custom_call.1']
    %9 = vsyncpa [#allocation3], 0
    %10 = vsyncpa [#allocation6], 0
    %11 = vsyncpa [#allocation4], 0
    %12 = vsyncpa [#allocation9], 0
    // Predicated region
    $region2: #{tpu_custom_call.1} parent=1 // pred_check
      _
    $region3: #{tpu_custom_call.1} parent=1 // pred_check_branch
      %14 = sbr.rel (0) target = $region5
    $region4: #{tpu_custom_call.1} parent=1 // pred_region
      %16 = vsyncadd [#allocation3], 0
      %s18 = sshll.u32 %s0, 4
      %s19 = int_to_ptr.hbm [resolvable:$true] %s18
      %s20 = sshll.u32 [#allocation2], 4
      %s21 = int_to_ptr.vmem [resolvable:$true] %s20
      %23 = dma.hbm_to_vmem [thread:$0]  %s19, 256, %s21, [#allocation3]
    $region5: #{tpu_custom_call.1} parent=1 // pred_fallthru
      _
    // Predicated region
    $region6: #{tpu_custom_call.1} parent=1 // pred_check
      _
    $region7: #{tpu_custom_call.1} parent=1 // pred_check_branch
      %25 = sbr.rel (0) target = $region9
    $region8: #{tpu_custom_call.1} parent=1 // pred_region
      %27 = vsyncadd [#allocation6], 0
      %s28 = sshll.u32 %s1, 4
      %s29 = int_to_ptr.hbm [resolvable:$true] %s28
      %s30 = sshll.u32 [#allocation5], 4
      %s31 = int_to_ptr.vmem [resolvable:$true] %s30
      %36 = dma.hbm_to_vmem [thread:$0]  %s29, 4096, %s31, [#allocation6], 128, 128, 8
    $region9: #{tpu_custom_call.1} parent=1 // pred_fallthru
      _
    // Predicated region
    $region10: #{tpu_custom_call.1} parent=1 // pred_check
      _
    $region11: #{tpu_custom_call.1} parent=1 // pred_check_branch
      %38 = sbr.rel (0) target = $region13
    $region12: #{tpu_custom_call.1} parent=1 // pred_region
      %40 = dma.done [#allocation3], 256
    $region13: #{tpu_custom_call.1} parent=1 // pred_fallthru
      _
    // Predicated region
    $region14: #{tpu_custom_call.1} parent=1 // pred_check
      _
    $region15: #{tpu_custom_call.1} parent=1 // pred_check_branch
      %42 = sbr.rel (0) target = $region17
    $region16: #{tpu_custom_call.1} parent=1 // pred_region
      %44 = dma.done [#allocation6], 4096
    $region17: #{tpu_custom_call.1} parent=1 // pred_fallthru
      _
    %v45 = vld [vmem:[#allocation2] sm:$0xff]
    %v46 = vld [vmem:[#allocation2 + $0x8] sm:$0xff]
    %v47 = vpack.c.bf16 %v45, %v45
    %v48 = vpack.c.bf16 %v46, %v46
    %v49 = vld [vmem:[#allocation5] sm:$0xff]
    %v50 = vld [vmem:[#allocation5 + $0x8] sm:$0xff]
    %v51 = vld [vmem:[#allocation5 + $0x10] sm:$0xff]
    %v52 = vld [vmem:[#allocation5 + $0x18] sm:$0xff]
    %v53 = vld [vmem:[#allocation5 + $0x20] sm:$0xff]
    %v54 = vld [vmem:[#allocation5 + $0x28] sm:$0xff]
    %v55 = vld [vmem:[#allocation5 + $0x30] sm:$0xff]
    %v56 = vld [vmem:[#allocation5 + $0x38] sm:$0xff]
    %v57 = vld [vmem:[#allocation5 + $0x40] sm:$0xff]
    %v58 = vld [vmem:[#allocation5 + $0x48] sm:$0xff]
    %v59 = vld [vmem:[#allocation5 + $0x50] sm:$0xff]
    %v60 = vld [vmem:[#allocation5 + $0x58] sm:$0xff]
    %v61 = vld [vmem:[#allocation5 + $0x60] sm:$0xff]
    %v62 = vld [vmem:[#allocation5 + $0x68] sm:$0xff]
    %v63 = vld [vmem:[#allocation5 + $0x70] sm:$0xff]
    %v64 = vld [vmem:[#allocation5 + $0x78] sm:$0xff]
    %v65 = vld [vmem:[#allocation5 + $0x80] sm:$0xff]
    %v66 = vld [vmem:[#allocation5 + $0x88] sm:$0xff]
    %v67 = vld [vmem:[#allocation5 + $0x90] sm:$0xff]
    %v68 = vld [vmem:[#allocation5 + $0x98] sm:$0xff]
    %v69 = vld [vmem:[#allocation5 + $0xa0] sm:$0xff]
    %v70 = vld [vmem:[#allocation5 + $0xa8] sm:$0xff]
    %v71 = vld [vmem:[#allocation5 + $0xb0] sm:$0xff]
    %v72 = vld [vmem:[#allocation5 + $0xb8] sm:$0xff]
    %v73 = vld [vmem:[#allocation5 + $0xc0] sm:$0xff]
    %v74 = vld [vmem:[#allocation5 + $0xc8] sm:$0xff]
    %v75 = vld [vmem:[#allocation5 + $0xd0] sm:$0xff]
    %v76 = vld [vmem:[#allocation5 + $0xd8] sm:$0xff]
    %v77 = vld [vmem:[#allocation5 + $0xe0] sm:$0xff]
    %v78 = vld [vmem:[#allocation5 + $0xe8] sm:$0xff]
    %v79 = vld [vmem:[#allocation5 + $0xf0] sm:$0xff]
    %v80 = vld [vmem:[#allocation5 + $0xf8] sm:$0xff]
    %v113 = vunpack.c.l.b16 %v49
    %v114 = vunpack.c.h.b16 %v49
    %v115 = vunpack.c.l.b16 %v50
    %v116 = vunpack.c.h.b16 %v50
    %v117 = vunpack.c.l.b16 %v51
    %v118 = vunpack.c.h.b16 %v51
    %v119 = vunpack.c.l.b16 %v52
    %v120 = vunpack.c.h.b16 %v52
    %v121 = vunpack.c.l.b16 %v53
    %v122 = vunpack.c.h.b16 %v53
    %v123 = vunpack.c.l.b16 %v54
    %v124 = vunpack.c.h.b16 %v54
    %v125 = vunpack.c.l.b16 %v55
    %v126 = vunpack.c.h.b16 %v55
    %v127 = vunpack.c.l.b16 %v56
    %v128 = vunpack.c.h.b16 %v56
    %v129 = vunpack.c.l.b16 %v57
    %v130 = vunpack.c.h.b16 %v57
    %v131 = vunpack.c.l.b16 %v58
    %v132 = vunpack.c.h.b16 %v58
    %v133 = vunpack.c.l.b16 %v59
    %v134 = vunpack.c.h.b16 %v59
    %v135 = vunpack.c.l.b16 %v60
    %v136 = vunpack.c.h.b16 %v60
    %v137 = vunpack.c.l.b16 %v61
    %v138 = vunpack.c.h.b16 %v61
    %v139 = vunpack.c.l.b16 %v62
    %v140 = vunpack.c.h.b16 %v62
    %v141 = vunpack.c.l.b16 %v63
    %v142 = vunpack.c.h.b16 %v63
    %v143 = vunpack.c.l.b16 %v64
    %v144 = vunpack.c.h.b16 %v64
    %v145 = vunpack.c.l.b16 %v65
    %v146 = vunpack.c.h.b16 %v65
    %v147 = vunpack.c.l.b16 %v66
    %v148 = vunpack.c.h.b16 %v66
    %v149 = vunpack.c.l.b16 %v67
    %v150 = vunpack.c.h.b16 %v67
    %v151 = vunpack.c.l.b16 %v68
    %v152 = vunpack.c.h.b16 %v68
    %v153 = vunpack.c.l.b16 %v69
    %v154 = vunpack.c.h.b16 %v69
    %v155 = vunpack.c.l.b16 %v70
    %v156 = vunpack.c.h.b16 %v70
    %v157 = vunpack.c.l.b16 %v71
    %v158 = vunpack.c.h.b16 %v71
    %v159 = vunpack.c.l.b16 %v72
    %v160 = vunpack.c.h.b16 %v72
    %v161 = vunpack.c.l.b16 %v73
    %v162 = vunpack.c.h.b16 %v73
    %v163 = vunpack.c.l.b16 %v74
    %v164 = vunpack.c.h.b16 %v74
    %v165 = vunpack.c.l.b16 %v75
    %v166 = vunpack.c.h.b16 %v75
    %v167 = vunpack.c.l.b16 %v76
    %v168 = vunpack.c.h.b16 %v76
    %v169 = vunpack.c.l.b16 %v77
    %v170 = vunpack.c.h.b16 %v77
    %v171 = vunpack.c.l.b16 %v78
    %v172 = vunpack.c.h.b16 %v78
    %v173 = vunpack.c.l.b16 %v79
    %v174 = vunpack.c.h.b16 %v79
    %v175 = vunpack.c.l.b16 %v80
    %v176 = vunpack.c.h.b16 %v80
    %v177 = vpack.c.b16 %v115, %v113
    %v178 = vpack.c.b16 %v116, %v114
    %v179 = vpack.c.b16 %v119, %v117
    %v180 = vpack.c.b16 %v120, %v118
    %v181 = vpack.c.b16 %v123, %v121
    %v182 = vpack.c.b16 %v124, %v122
    %v183 = vpack.c.b16 %v127, %v125
    %v184 = vpack.c.b16 %v128, %v126
    %v185 = vpack.c.b16 %v131, %v129
    %v186 = vpack.c.b16 %v132, %v130
    %v187 = vpack.c.b16 %v135, %v133
    %v188 = vpack.c.b16 %v136, %v134
    %v189 = vpack.c.b16 %v139, %v137
    %v190 = vpack.c.b16 %v140, %v138
    %v191 = vpack.c.b16 %v143, %v141
    %v192 = vpack.c.b16 %v144, %v142
    %v193 = vpack.c.b16 %v147, %v145
    %v194 = vpack.c.b16 %v148, %v146
    %v195 = vpack.c.b16 %v151, %v149
    %v196 = vpack.c.b16 %v152, %v150
    %v197 = vpack.c.b16 %v155, %v153
    %v198 = vpack.c.b16 %v156, %v154
    %v199 = vpack.c.b16 %v159, %v157
    %v200 = vpack.c.b16 %v160, %v158
    %v201 = vpack.c.b16 %v163, %v161
    %v202 = vpack.c.b16 %v164, %v162
    %v203 = vpack.c.b16 %v167, %v165
    %v204 = vpack.c.b16 %v168, %v166
    %v205 = vpack.c.b16 %v171, %v169
    %v206 = vpack.c.b16 %v172, %v170
    %v207 = vpack.c.b16 %v175, %v173
    %v208 = vpack.c.b16 %v176, %v174
    %241 = vmatpush.bf16.msra.mxu0 %v191
    %242 = vmatpush.bf16.msra.mxu0 %v189
    %243 = vmatpush.bf16.msra.mxu0 %v187
    %244 = vmatpush.bf16.msra.mxu0 %v185
    %245 = vmatpush.bf16.msra.mxu0 %v183
    %246 = vmatpush.bf16.msra.mxu0 %v181
    %247 = vmatpush.bf16.msra.mxu0 %v179
    %248 = vmatpush.bf16.msra.mxu0 %v177
    %249 = vmatmul.bf16.gmra.mxu0 %v47
    %v250 = vpop.f32.mrf.mxu0
    %v251 = vadd.f32 0.0, %v250
    %v252 = vpop.f32.mrf.mxu0
    %253 = vdwg.mxu0
    %254 = vmatpush.bf16.msra.mxu0 %v207
    %255 = vmatpush.bf16.msra.mxu0 %v205
    %256 = vmatpush.bf16.msra.mxu0 %v203
    %257 = vmatpush.bf16.msra.mxu0 %v201
    %258 = vmatpush.bf16.msra.mxu0 %v199
    %259 = vmatpush.bf16.msra.mxu0 %v197
    %260 = vmatpush.bf16.msra.mxu0 %v195
    %261 = vmatpush.bf16.msra.mxu0 %v193
    %262 = vmatmul.bf16.gmra.mxu0 %v48
    %v263 = vpop.f32.mrf.mxu0
    %v264 = vadd.f32 %v251, %v263
    %v265 = vpop.f32.mrf.mxu0
    %266 = vdwg.mxu0
    %267 = vmatpush.bf16.msra.mxu0 %v192
    %268 = vmatpush.bf16.msra.mxu0 %v190
    %269 = vmatpush.bf16.msra.mxu0 %v188
    %270 = vmatpush.bf16.msra.mxu0 %v186
    %271 = vmatpush.bf16.msra.mxu0 %v184
    %272 = vmatpush.bf16.msra.mxu0 %v182
    %273 = vmatpush.bf16.msra.mxu0 %v180
    %274 = vmatpush.bf16.msra.mxu0 %v178
    %275 = vmatmul.bf16.gmra.mxu0 %v47
    %v276 = vpop.f32.mrf.mxu0
    %v277 = vadd.f32 0.0, %v276
    %v278 = vpop.f32.mrf.mxu0
    %279 = vdwg.mxu0
    %280 = vmatpush.bf16.msra.mxu0 %v208
    %281 = vmatpush.bf16.msra.mxu0 %v206
    %282 = vmatpush.bf16.msra.mxu0 %v204
    %283 = vmatpush.bf16.msra.mxu0 %v202
    %284 = vmatpush.bf16.msra.mxu0 %v200
    %285 = vmatpush.bf16.msra.mxu0 %v198
    %286 = vmatpush.bf16.msra.mxu0 %v196
    %287 = vmatpush.bf16.msra.mxu0 %v194
    %288 = vmatmul.bf16.gmra.mxu0 %v48
    %v289 = vpop.f32.mrf.mxu0
    %v290 = vadd.f32 %v277, %v289
    %v291 = vpop.f32.mrf.mxu0
    %292 = vdwg.mxu0
    %v293 = vpack.c.bf16 %v290, %v264
    %294 = vst [vmem:[#allocation7] sm:$0xff] %v293
    %v295 = vrot.slane %v264, 4
    %v296 = vadd.f32 %v264, %v295
    %v297 = vrot.slane %v296, 2
    %v298 = vadd.f32 %v296, %v297
    %v299 = vrot.slane %v298, 1
    %v300 = vadd.f32 %v298, %v299
    %v301 = vrot.slane %v290, 4
    %v302 = vadd.f32 %v290, %v301
    %v303 = vrot.slane %v302, 2
    %v304 = vadd.f32 %v302, %v303
    %v305 = vrot.slane %v304, 1
    %v306 = vadd.f32 %v304, %v305
    %v307 = vmul.f32 %v264, %v264
    %v308 = vmul.f32 %v290, %v290
    %v309 = vrot.slane %v307, 4
    %v310 = vadd.f32 %v307, %v309
    %v311 = vrot.slane %v310, 2
    %v312 = vadd.f32 %v310, %v311
    %v313 = vrot.slane %v312, 1
    %v314 = vadd.f32 %v312, %v313
    %v315 = vrot.slane %v308, 4
    %v316 = vadd.f32 %v308, %v315
    %v317 = vrot.slane %v316, 2
    %v318 = vadd.f32 %v316, %v317
    %v319 = vrot.slane %v318, 1
    %v320 = vadd.f32 %v318, %v319
    %vm321 = vcmask 1040384
    %v322 = vsel %vm321, %v300, %v314
    %v323 = vsel %vm321, %v306, %v320
    %v326 = vrot.slane %v323, 6
    %vm327 = vcmask 1041408
    %v328 = vsel %vm327, %v322, %v326
    %330 = vst [vmem:[#allocation8] sm:$0xf] %v328
    // Predicated region
    $region18: #{tpu_custom_call.1} parent=1 // pred_check
      _
    $region19: #{tpu_custom_call.1} parent=1 // pred_check_branch
      %332 = sbr.rel (0) target = $region21
    $region20: #{tpu_custom_call.1} parent=1 // pred_region
      %334 = vsyncadd [#allocation4], 0
      %s336 = sshll.u32 [#allocation7], 4
      %s337 = int_to_ptr.vmem [resolvable:$true] %s336
      %s338 = sshll.u32 %s2, 4
      %s339 = int_to_ptr.hbm [resolvable:$true] %s338
      %341 = dma.vmem_to_hbm [thread:$0]  %s337, 128, %s339, [#allocation4]
    $region21: #{tpu_custom_call.1} parent=1 // pred_fallthru
      _
    // Predicated region
    $region22: #{tpu_custom_call.1} parent=1 // pred_check
      _
    $region23: #{tpu_custom_call.1} parent=1 // pred_check_branch
      %343 = sbr.rel (0) target = $region25
    $region24: #{tpu_custom_call.1} parent=1 // pred_region
      %345 = vsyncadd [#allocation9], 0
      %s347 = sshll.u32 [#allocation8], 4
      %s348 = int_to_ptr.vmem [resolvable:$true] %s347
      %s349 = sshll.u32 %s3, 4
      %s350 = int_to_ptr.hbm [resolvable:$true] %s349
      %352 = dma.vmem_to_hbm [thread:$0]  %s348, 64, %s350, [#allocation9]
    $region25: #{tpu_custom_call.1} parent=1 // pred_fallthru
      _
    // Predicated region
    $region26: #{tpu_custom_call.1} parent=1 // pred_check
      _
    $region27: #{tpu_custom_call.1} parent=1 // pred_check_branch
      %354 = sbr.rel (0) target = $region29
    $region28: #{tpu_custom_call.1} parent=1 // pred_region
      %356 = dma.done [#allocation4], 128
    $region29: #{tpu_custom_call.1} parent=1 // pred_fallthru
      _
    // Predicated region
    $region30: #{tpu_custom_call.1} parent=1 // pred_check
      _
    $region31: #{tpu_custom_call.1} parent=1 // pred_check_branch
      %358 = sbr.rel (0) target = $region33
    $region32: #{tpu_custom_call.1} parent=1 // pred_region
      %360 = dma.done [#allocation9], 64
    $region33: #{tpu_custom_call.1} parent=1 // pred_fallthru
      _
    %361 = vsyncpa [#allocation3], 1
    %362 = vsyncpa [#allocation6], 1
    %363 = vsyncpa [#allocation4], 1
    %364 = vsyncpa [#allocation9], 1

</llo_original>
